<compile_context>
chip_gen: v5e
topology: v5e:2x2
jax: 0.10.0
libtpu: 0.0.40
codegen_flags: <defaults>
</compile_context>

<pallas_src>
import math
from typing import Optional, Sequence, Union

import numpy as np
import jax
import jax.numpy as jnp
from jax.experimental import pallas as pl
from jax.experimental.pallas import tpu as pltpu

_MAX_BATCH_TILE = 8   # prefer wide token tiles over wide batch tiles (DMA contiguity)


# ----------------------------------------------------------------------------
# Pallas kernel: x + pos_embed (pos broadcast over batch), f32 accumulate
# ----------------------------------------------------------------------------
def _add_pos_kernel(x_ref, pos_ref, o_ref):
    x = x_ref[...].astype(jnp.float32)            # (TB, TN, D)
    p = pos_ref[...].astype(jnp.float32)          # (1,  TN, D) -> broadcasts over TB
    o_ref[...] = (x + p).astype(o_ref.dtype)


def _vmem_capacity_bytes() -> int:
    try:
        cap = getattr(pltpu.get_tpu_info(), "vmem_capacity_bytes", None)
        if cap:
            return int(cap)
    except Exception:
        pass
    return 64 << 20   # conservative default: v7x per-TensorCore VMEM


def _choose_tiles(B: int, N: int, D: int, x_itemsize: int, pos_itemsize: int):
    """Pick (TB, TN, vmem_limit): TB batch rows x TN tokens x full D per block."""
    cap = _vmem_capacity_bytes()
    if cap <= (64 << 20):                      # v7x-class: 64 MiB phys, 32 MiB scoped
        total_budget, vmem_limit = 20 << 20, 32 << 20
    else:                                      # v5e / v6e: 128 MiB physical VMEM
        total_budget, vmem_limit = 48 << 20, 64 << 20

    TB = B if B <= _MAX_BATCH_TILE else _MAX_BATCH_TILE
    # Pipelined VMEM per token row: 2 x-in buffers + 2 out buffers + 2 pos buffers.
    row_bytes = 4 * TB * D * x_itemsize + 2 * D * pos_itemsize
    sub = 8 * max(1, 4 // x_itemsize)          # sublane packing: 8 f32 / 16 bf16 / 32 i8
    tn_cap = max(sub, (total_budget // row_bytes) // sub * sub)
    TN = N if N <= tn_cap else tn_cap          # full dim, or a multiple of `sub`
    return TB, TN, vmem_limit


def add_pos_embed(x: jax.Array, pos: jax.Array) -> jax.Array:
    """x: (B, N, D); pos: (1, N, D). Returns (x + pos) broadcast over batch, in x.dtype."""
    B, N, D = x.shape
    assert pos.shape == (1, N, D), (pos.shape, x.shape)

    TB, TN, vmem_limit = _choose_tiles(B, N, D, x.dtype.itemsize, pos.dtype.itemsize)
    # Batch innermost: pos block index is constant over the inner loop, so pos is
    # DMA'd from HBM once per token tile (total pos traffic = N*D, not B*N*D).
    grid = (pl.cdiv(N, TN), pl.cdiv(B, TB))

    cost = pl.CostEstimate(
        flops=B * N * D,
        transcendentals=0,
        bytes_accessed=2 * B * N * D * x.dtype.itemsize + N * D * pos.dtype.itemsize,
    )

    # TODO(synk): on v7x, shard the outer token-tile axis across the 2 TensorCores
    # (pltpu.CORE_PARALLEL / pl.core_map) once the target generation is pinned;
    # plain "parallel" semantics are kept here for portability across v5e/v6e/v7x.
    out = pl.pallas_call(
        _add_pos_kernel,
        out_shape=jax.ShapeDtypeStruct((B, N, D), x.dtype),
        grid=grid,
        in_specs=[
            pl.BlockSpec((TB, TN, D), lambda t, b: (b, t, 0)),   # x slab
            pl.BlockSpec((1, TN, D), lambda t, b: (0, t, 0)),    # pos: const over inner b
        ],
        out_specs=pl.BlockSpec((TB, TN, D), lambda t, b: (b, t, 0)),
        # Semantically x += pos: donate x at the jit boundary to realize in-place reuse;
        # non-donated / eager callers just get a protective copy (still correct).
        input_output_aliases={0: 0},
        cost_estimate=cost,
        compiler_params=pltpu.CompilerParams(
            dimension_semantics=("parallel", "parallel"),
            vmem_limit_bytes=vmem_limit,
        ),
    )(x, pos)
    return out


# ----------------------------------------------------------------------------
# Plain-JAX glue (parameter setup / permutations / resample of the tiny param)
# ----------------------------------------------------------------------------
def to_2tuple(v):
    if isinstance(v, (tuple, list)):
        return (int(v[0]), int(v[1]))
    return (int(v), int(v))


def conv_out_shape(fstride, tstride, patch_size, input_fdim, input_tdim):
    """Equivalent of FlexiPosEmbed.get_shape (valid conv, stride (fstride, tstride))."""
    pf, pt = to_2tuple(patch_size)
    f_dim = (input_fdim - pf) // fstride + 1
    t_dim = (input_tdim - pt) // tstride + 1
    return (f_dim, t_dim)


def resample_abs_pos_embed_jax(posemb, new_size, old_size, num_prefix_tokens=1,
                               pos_embed_prefix=True):
    new_size = to_2tuple(new_size)
    new_ntok = new_size[0] * new_size[1]
    if old_size is None:
        old_size = to_2tuple(int(math.sqrt(posemb.shape[1] - num_prefix_tokens)))
    else:
        old_size = to_2tuple(old_size)
    if new_size == old_size:
        return posemb
    if num_prefix_tokens > 0 and pos_embed_prefix:
        prefix, posemb = posemb[:, :num_prefix_tokens], posemb[:, num_prefix_tokens:]
    else:
        prefix = None
    grid = posemb.reshape(1, old_size[0], old_size[1], -1)
    # TODO(synk): torch F.interpolate(bilinear, antialias=True) is matched with
    # jax.image.resize's triangle kernel; exact filter-window edge handling may
    # differ slightly when downsampling (only the tiny (1,N,D) parameter is touched).
    grid = jax.image.resize(
        grid, (1, new_size[0], new_size[1], grid.shape[-1]),
        method="bilinear", antialias=True)
    posemb = grid.reshape(1, new_ntok, -1)
    if prefix is not None:
        posemb = jnp.concatenate([prefix, posemb], axis=1)
    return posemb


# --- token-prefix shuffle as static index permutations (no full-tensor copies) ---
def _perm_insert_to_prefix(n_tokens: int, from_poses: Sequence[int]) -> np.ndarray:
    idx = np.arange(n_tokens)
    for i, p in enumerate(from_poses):
        idx = np.concatenate([idx[:i], idx[p:p + 1], idx[i:p], idx[p + 1:]])
    return idx


def _perm_insert_from_prefix(n_tokens: int, to_poses: Sequence[int]) -> np.ndarray:
    idx = np.arange(n_tokens)
    k = len(to_poses)
    prefix, rest = idx[:k], idx[k:]
    for i, p in enumerate(to_poses):
        rest = np.concatenate([rest[:p], prefix[i:i + 1], rest[p:]])
    return rest


# Concatenate-based references (match torch semantics exactly; used for testing).
def insert_to_prefix(x, from_poses: Union[int, Sequence[int]]):
    if isinstance(from_poses, int):
        from_poses = [from_poses]
    for i, p in enumerate(from_poses):
        x = jnp.concatenate([x[:, :i], x[:, p:p + 1], x[:, i:p], x[:, p + 1:]], axis=1)
    return x


def insert_from_prefix(x, to_poses: Union[int, Sequence[int]]):
    if isinstance(to_poses, int):
        to_poses = [to_poses]
    x_prefix, x = x[:, :len(to_poses)], x[:, len(to_poses):]
    for i, p in enumerate(to_poses):
        x = jnp.concatenate([x[:, :p], x_prefix[:, i:i + 1], x[:, p:]], axis=1)
    return x


class FlexiPosEmbedPallas:
    """JAX/Pallas re-implementation of FlexiPosEmbed (deterministic synthetic init)."""

    def __init__(self,
                 input_size=(128, 1024),
                 patch_size=(16, 16),
                 strides=(16, 16),
                 pos_grid_size: Optional[tuple] = (8, 64),
                 embed_dim: int = 192,
                 n_prefix_tokens: int = 1,
                 pos_embed_prefix: bool = True,
                 init_key: jax.Array = None,
                 min_pallas_bytes: int = 256 * 1024):
        self.input_size = to_2tuple(input_size)
        self.patch_size = to_2tuple(patch_size)
        self.strides = to_2tuple(strides)
        if pos_grid_size is None:
            self.pos_grid_size = conv_out_shape(*self.strides, self.patch_size,
                                                *self.input_size)
        else:
            self.pos_grid_size = to_2tuple(pos_grid_size)
        self.n_prefix_tokens = n_prefix_tokens
        self.pos_embed_prefix = pos_embed_prefix
        self.embed_dim = embed_dim
        self.min_pallas_bytes = min_pallas_bytes

        num_patches = self.pos_grid_size[0] * self.pos_grid_size[1]
        n_tok = num_patches + (n_prefix_tokens if pos_embed_prefix else 0)
        if init_key is None:
            init_key = jax.random.PRNGKey(42)
        # trunc_normal_(std=0.02), truncated at +-2 std — deterministic synthetic init.
        self.pos_embed = (0.02 * jax.random.truncated_normal(
            init_key, -2.0, 2.0, (1, n_tok, embed_dim), jnp.float32))

    def _add(self, x, pos):
        # Only dispatch to Pallas above a size threshold; tiny tensors are faster
        # through XLA's fused broadcast add (fixed pallas_call overhead dominates).
        if x.size * x.dtype.itemsize >= self.min_pallas_bytes:
            return add_pos_embed(x, pos)          # <- Pallas hot path
        return (x.astype(jnp.float32) + pos.astype(jnp.float32)).astype(x.dtype)

    def __call__(self, x, patch_size=None, strides=None, token_position=None):
        # 1) positional embedding for this call (tiny parameter-side work, plain JAX)
        if patch_size is None and strides is None:
            pos = self.pos_embed
        else:
            if patch_size is None:
                patch_size = self.patch_size
            if strides is None:
                strides = self.strides
            patch_size = to_2tuple(patch_size)
            strides = to_2tuple(strides)
            new_size = conv_out_shape(*strides, patch_size, *self.input_size)
            pos = resample_abs_pos_embed_jax(
                self.pos_embed, new_size, self.pos_grid_size,
                num_prefix_tokens=self.n_prefix_tokens,
                pos_embed_prefix=self.pos_embed_prefix)
            if not self.pos_embed_prefix:
                # prefix tokens receive no positional embedding -> zero-pad so a single
                # uniform add covers the whole (permuted) sequence.
                pad = jnp.zeros((1, self.n_prefix_tokens, pos.shape[-1]), pos.dtype)
                pos = jnp.concatenate([pad, pos], axis=1)

        # 2) fold the token_position prefix shuffle into gathers:
        #    out = P_out(P_in(x) + pos) = x[net] + pos[idx_out].  net is the identity
        #    in the common case (same positions in and out), so the two full-tensor
        #    concatenate passes over x collapse to at most one gather on x plus a
        #    gather on the tiny pos parameter.
        if token_position is not None:
            tp = ([token_position] if isinstance(token_position, int)
                  else list(token_position))
            n_tok = x.shape[1]
            idx_in = _perm_insert_to_prefix(n_tok, tp)
            idx_out = _perm_insert_from_prefix(n_tok, tp)
            net = idx_in[idx_out]
            pos = jnp.take(pos, jnp.asarray(idx_out), axis=1)
            if not np.array_equal(net, np.arange(n_tok)):
                # TODO(synk): if this ever gets hot, fuse the gather into the kernel
                # via PrefetchScalarGridSpec row-gather instead of a separate pass.
                x = jnp.take(x, jnp.asarray(net), axis=1)

        return self._add(x, pos)


if __name__ == "__main__":
    key = jax.random.PRNGKey(0)
    k1, k2 = jax.random.split(key)

    # ---- 1) Pallas hot path: module-default pos grid (8, 64), embed_dim=192 ----
    module = FlexiPosEmbedPallas(
        input_size=(128, 1024), patch_size=(16, 16), strides=(16, 16),
        pos_grid_size=(8, 64), embed_dim=192, n_prefix_tokens=1,
        pos_embed_prefix=True, init_key=jax.random.PRNGKey(42))
    B, N, D = 2, 8 * 64 + 1, 192
    x = jax.random.normal(k1, (B, N, D), jnp.float32)

    y = module(x)                                   # >= threshold -> Pallas kernel
    jax.block_until_ready(y)
    ref = x + module.pos_embed
    assert y.shape == (B, N, D)
    assert jnp.allclose(y, ref, atol=1e-5, rtol=1e-5), "Pallas add_pos_embed mismatch"

    # token_position path (gather-folded) vs original concatenate semantics.
    y2 = module(x, token_position=3)
    jax.block_until_ready(y2)
    ref2 = insert_from_prefix(insert_to_prefix(x, 3) + module.pos_embed, 3)
    assert y2.shape == (B, N, D)
    assert jnp.allclose(y2, ref2, atol=1e-5, rtol=1e-5), "token_position path mismatch"

    # multi-position list with a non-trivial net permutation.
    y3 = module(x, token_position=[5, 3])
    jax.block_until_ready(y3)
    ref3 = insert_from_prefix(insert_to_prefix(x, [5, 3]) + module.pos_embed, [5, 3])
    assert jnp.allclose(y3, ref3, atol=1e-5, rtol=1e-5), "multi token_position mismatch"

    # ---- 2) bf16 activations: f32 accumulate in-kernel, bf16 output (loose tol) ----
    xb = x.astype(jnp.bfloat16)
    yb = module(xb)
    jax.block_until_ready(yb)
    refb = (xb.astype(jnp.float32) + module.pos_embed).astype(jnp.bfloat16)
    assert jnp.allclose(yb.astype(jnp.float32), refb.astype(jnp.float32),
                        atol=2e-2, rtol=2e-2), "bf16 path mismatch"

    # ---- 3) Tiny shape: module takes XLA fallback; kernel smoke-tested directly ----
    pos_grid, n_prefix, D_s = (2, 4), 1, 32
    small = FlexiPosEmbedPallas(
        input_size=(32, 64), patch_size=(16, 16), strides=(16, 16),
        pos_grid_size=pos_grid, embed_dim=D_s, n_prefix_tokens=n_prefix,
        pos_embed_prefix=True, init_key=jax.random.PRNGKey(7))
    Ns = pos_grid[0] * pos_grid[1] + n_prefix       # 9 tokens
    xs = jax.random.normal(k2, (2, Ns, D_s), jnp.float32)

    ys = small(xs)                                  # below threshold -> plain XLA add
    jax.block_until_ready(ys)
    assert jnp.allclose(ys, xs + small.pos_embed, atol=1e-6)

    yk = add_pos_embed(xs, small.pos_embed)         # force the Pallas kernel on tiny shape
    jax.block_until_ready(yk)
    assert jnp.allclose(yk, xs + small.pos_embed, atol=1e-6), "tiny Pallas mismatch"

    print("KERNEL_OK")
</pallas_src>

<mosaic_0001>
module attributes {stable_mosaic.version = 11 : i64} {
  func.func @_add_pos_kernel(%arg0: i32, %arg1: i32, %arg2: memref<2x513x192xf32, #tpu.memory_space<vmem>>, %arg3: memref<1x513x192xf32, #tpu.memory_space<vmem>>, %arg4: memref<2x513x192xf32, #tpu.memory_space<vmem>>) attributes {dimension_semantics = [#tpu.dimension_semantics<parallel>, #tpu.dimension_semantics<parallel>], iteration_bounds = array<i64: 1, 1>, scalar_prefetch = 0 : i64, scratch_operands = 0 : i64, tpu.core_type = #tpu.core_type<tc>, window_params = [{transform_indices = @transform_0, window_bounds = array<i64: 2, 513, 192>}, {transform_indices = @transform_1, window_bounds = array<i64: 1, 513, 192>}, {transform_indices = @transform_2, window_bounds = array<i64: 2, 513, 192>}]} {
    %c0 = arith.constant 0 : index
    %c0_0 = arith.constant 0 : index
    %c0_1 = arith.constant 0 : index
    %0 = vector.load %arg2[%c0, %c0_0, %c0_1] : memref<2x513x192xf32, #tpu.memory_space<vmem>>, vector<2x513x192xf32>
    %c0_2 = arith.constant 0 : index
    %c0_3 = arith.constant 0 : index
    %c0_4 = arith.constant 0 : index
    %1 = vector.load %arg3[%c0_2, %c0_3, %c0_4] : memref<1x513x192xf32, #tpu.memory_space<vmem>>, vector<1x513x192xf32>
    %2 = vector.broadcast %1 : vector<1x513x192xf32> to vector<2x513x192xf32>
    %3 = arith.addf %0, %2 : vector<2x513x192xf32>
    %c0_5 = arith.constant 0 : index
    %c0_6 = arith.constant 0 : index
    %c0_7 = arith.constant 0 : index
    %4 = vector.load %arg4[%c0_5, %c0_6, %c0_7] : memref<2x513x192xf32, #tpu.memory_space<vmem>>, vector<2x513x192xf32>
    tpu.vector_store %arg4[%c0_5, %c0_6, %c0_7], %3 {strides = array<i32>} : memref<2x513x192xf32, #tpu.memory_space<vmem>>, vector<2x513x192xf32>,
    return
  }
  func.func @transform_0(%arg0: i32, %arg1: i32) -> (i32, i32, i32) {
    %c0_i32 = arith.constant 0 : i32
    %c0_i32_0 = arith.constant 0 : i32
    return %arg1, %arg0, %c0_i32 : i32, i32, i32
  }
  func.func @transform_1(%arg0: i32, %arg1: i32) -> (i32, i32, i32) {
    %c0_i32 = arith.constant 0 : i32
    %c0_i32_0 = arith.constant 0 : i32
    %c0_i32_1 = arith.constant 0 : i32
    return %c0_i32, %arg0, %c0_i32_0 : i32, i32, i32
  }
  func.func @transform_2(%arg0: i32, %arg1: i32) -> (i32, i32, i32) {
    %c0_i32 = arith.constant 0 : i32
    %c0_i32_0 = arith.constant 0 : i32
    return %arg1, %arg0, %c0_i32 : i32, i32, i32
  }
}

</mosaic_0001>

<llo_original>
// kernel: tpu_custom_call.1
$region0: #{tpu_custom_call.1}
  #allocation0 [shape = 'u32[]', space=smem, size = 0x4, offset = 0x4, fixed_abs, tag = 'smem constant byte address 0x4 - core index']
  #allocation1 [shape = 'u32[72,128]{1,0:T(1,128)}', space=vmem, size = 0x9000, scoped, tag = 'internal scratch']
  %s0 = inlined_call_operand.vmem [shape: f32[2,513,192], index: 0, kind: input, shape index: {}, may-alias: {0,2}]
  %s1 = inlined_call_operand.vmem [shape: f32[1,513,192], index: 1, kind: input, shape index: {}]
  %s2 = inlined_call_operand.vmem [shape: f32[2,513,192], index: 2, kind: output, shape index: {}, may-alias: {0,2}]
  %s3 = sld [smem:[#allocation0]]
  $region18: #{tpu_custom_call.1} parent=0
    _
  %s5 = ssub.s32 1, %s3
  %s6 = scalar_select 0, %s5, %s3
  // Predicated region
  $region2: #{tpu_custom_call.1} parent=0 // pred_check
    _
  $region3: #{tpu_custom_call.1} parent=0 // pred_check_branch
    %8 = sbr.rel (0) target = $region5
  $region4: #{tpu_custom_call.1} parent=0 // pred_region
    _
  $region5: #{tpu_custom_call.1} parent=0 // pred_fallthru
    _
  // Predicated region
  $region6: #{tpu_custom_call.1} parent=0 // pred_check
    _
  $region7: #{tpu_custom_call.1} parent=0 // pred_check_branch
    %10 = sbr.rel (0) target = $region9
  $region8: #{tpu_custom_call.1} parent=0 // pred_region
    _
  $region9: #{tpu_custom_call.1} parent=0 // pred_fallthru
    _
  %v11 = vld [vmem:[%s0] sm:$0xff]
  %v12 = vld [vmem:[%s0 + $0x8] sm:$0xff]
  %v13 = vld [vmem:[%s0 + $0x10] sm:$0xff]
  %v14 = vld [vmem:[%s0 + $0x18] sm:$0xff]
  %v15 = vld [vmem:[%s0 + $0x20] sm:$0xff]
  %v16 = vld [vmem:[%s0 + $0x28] sm:$0xff]
  %v17 = vld [vmem:[%s0 + $0x30] sm:$0xff]
  %v18 = vld [vmem:[%s0 + $0x38] sm:$0xff]
  %v19 = vld [vmem:[%s0 + $0x40] sm:$0xff]
  %v20 = vld [vmem:[%s0 + $0x48] sm:$0xff]
  %v21 = vld [vmem:[%s0 + $0x50] sm:$0xff]
  %v22 = vld [vmem:[%s0 + $0x58] sm:$0xff]
  %v23 = vld [vmem:[%s0 + $0x60] sm:$0xff]
  %v24 = vld [vmem:[%s0 + $0x68] sm:$0xff]
  %v25 = vld [vmem:[%s0 + $0x70] sm:$0xff]
  %v26 = vld [vmem:[%s0 + $0x78] sm:$0xff]
  %v27 = vld [vmem:[%s0 + $0x80] sm:$0xff]
  %v28 = vld [vmem:[%s0 + $0x88] sm:$0xff]
  %v29 = vld [vmem:[%s0 + $0x90] sm:$0xff]
  %v30 = vld [vmem:[%s0 + $0x98] sm:$0xff]
  %v31 = vld [vmem:[%s0 + $0xa0] sm:$0xff]
  %v32 = vld [vmem:[%s0 + $0xa8] sm:$0xff]
  %v33 = vld [vmem:[%s0 + $0xb0] sm:$0xff]
  %v34 = vld [vmem:[%s0 + $0xb8] sm:$0xff]
  %v35 = vld [vmem:[%s0 + $0xc0] sm:$0xff]
  %v36 = vld [vmem:[%s0 + $0xc8] sm:$0xff]
  %v37 = vld [vmem:[%s0 + $0xd0] sm:$0xff]
  %v38 = vld [vmem:[%s0 + $0xd8] sm:$0xff]
  %v39 = vld [vmem:[%s0 + $0xe0] sm:$0xff]
  %v40 = vld [vmem:[%s0 + $0xe8] sm:$0xff]
  %v41 = vld [vmem:[%s0 + $0xf0] sm:$0xff]
  %v42 = vld [vmem:[%s0 + $0xf8] sm:$0xff]
  %v43 = vld [vmem:[%s0 + $0x100] sm:$0xff]
  %v44 = vld [vmem:[%s0 + $0x108] sm:$0xff]
  %v45 = vld [vmem:[%s0 + $0x110] sm:$0xff]
  %v46 = vld [vmem:[%s0 + $0x118] sm:$0xff]
  %v47 = vld [vmem:[%s0 + $0x120] sm:$0xff]
  %v48 = vld [vmem:[%s0 + $0x128] sm:$0xff]
  %v49 = vld [vmem:[%s0 + $0x130] sm:$0xff]
  %v50 = vld [vmem:[%s0 + $0x138] sm:$0xff]
  %v51 = vld [vmem:[%s0 + $0x140] sm:$0xff]
  %v52 = vld [vmem:[%s0 + $0x148] sm:$0xff]
  %v53 = vld [vmem:[%s0 + $0x150] sm:$0xff]
  %v54 = vld [vmem:[%s0 + $0x158] sm:$0xff]
  %v55 = vld [vmem:[%s0 + $0x160] sm:$0xff]
  %v56 = vld [vmem:[%s0 + $0x168] sm:$0xff]
  %v57 = vld [vmem:[%s0 + $0x170] sm:$0xff]
  %v58 = vld [vmem:[%s0 + $0x178] sm:$0xff]
  %v59 = vld [vmem:[%s0 + $0x180] sm:$0xff]
  %v60 = vld [vmem:[%s0 + $0x188] sm:$0xff]
  %v61 = vld [vmem:[%s0 + $0x190] sm:$0xff]
  %v62 = vld [vmem:[%s0 + $0x198] sm:$0xff]
  %v63 = vld [vmem:[%s0 + $0x1a0] sm:$0xff]
  %v64 = vld [vmem:[%s0 + $0x1a8] sm:$0xff]
  %v65 = vld [vmem:[%s0 + $0x1b0] sm:$0xff]
  %v66 = vld [vmem:[%s0 + $0x1b8] sm:$0xff]
  %v67 = vld [vmem:[%s0 + $0x1c0] sm:$0xff]
  %v68 = vld [vmem:[%s0 + $0x1c8] sm:$0xff]
  %v69 = vld [vmem:[%s0 + $0x1d0] sm:$0xff]
  %v70 = vld [vmem:[%s0 + $0x1d8] sm:$0xff]
  %v71 = vld [vmem:[%s0 + $0x1e0] sm:$0xff]
  %v72 = vld [vmem:[%s0 + $0x1e8] sm:$0xff]
  %v73 = vld [vmem:[%s0 + $0x1f0] sm:$0xff]
  %v74 = vld [vmem:[%s0 + $0x1f8] sm:$0xff]
  %v75 = vld [vmem:[%s0 + $0x200] sm:$0xff]
  %v76 = vld [vmem:[%s0 + $0x208] sm:$0xff]
  %v77 = vld [vmem:[%s0 + $0x210] sm:$0xff]
  %v78 = vld [vmem:[%s0 + $0x218] sm:$0xff]
  %v79 = vld [vmem:[%s0 + $0x220] sm:$0xff]
  %v80 = vld [vmem:[%s0 + $0x228] sm:$0xff]
  %v81 = vld [vmem:[%s0 + $0x230] sm:$0xff]
  %v82 = vld [vmem:[%s0 + $0x238] sm:$0xff]
  %v83 = vld [vmem:[%s0 + $0x240] sm:$0xff]
  %v84 = vld [vmem:[%s0 + $0x248] sm:$0xff]
  %v85 = vld [vmem:[%s0 + $0x250] sm:$0xff]
  %v86 = vld [vmem:[%s0 + $0x258] sm:$0xff]
  %v87 = vld [vmem:[%s0 + $0x260] sm:$0xff]
  %v88 = vld [vmem:[%s0 + $0x268] sm:$0xff]
  %v89 = vld [vmem:[%s0 + $0x270] sm:$0xff]
  %v90 = vld [vmem:[%s0 + $0x278] sm:$0xff]
  %v91 = vld [vmem:[%s0 + $0x280] sm:$0xff]
  %v92 = vld [vmem:[%s0 + $0x288] sm:$0xff]
  %v93 = vld [vmem:[%s0 + $0x290] sm:$0xff]
  %v94 = vld [vmem:[%s0 + $0x298] sm:$0xff]
  %v95 = vld [vmem:[%s0 + $0x2a0] sm:$0xff]
  %v96 = vld [vmem:[%s0 + $0x2a8] sm:$0xff]
  %v97 = vld [vmem:[%s0 + $0x2b0] sm:$0xff]
  %v98 = vld [vmem:[%s0 + $0x2b8] sm:$0xff]
  %v99 = vld [vmem:[%s0 + $0x2c0] sm:$0xff]
  %v100 = vld [vmem:[%s0 + $0x2c8] sm:$0xff]
  %v101 = vld [vmem:[%s0 + $0x2d0] sm:$0xff]
  %v102 = vld [vmem:[%s0 + $0x2d8] sm:$0xff]
  %v103 = vld [vmem:[%s0 + $0x2e0] sm:$0xff]
  %v104 = vld [vmem:[%s0 + $0x2e8] sm:$0xff]
  %v105 = vld [vmem:[%s0 + $0x2f0] sm:$0xff]
  %v106 = vld [vmem:[%s0 + $0x2f8] sm:$0xff]
  %v107 = vld [vmem:[%s0 + $0x300] sm:$0xff]
  %v108 = vld [vmem:[%s0 + $0x308] sm:$0xff]
  %v109 = vld [vmem:[%s0 + $0x310] sm:$0xff]
  %v110 = vld [vmem:[%s0 + $0x318] sm:$0xff]
  %v111 = vld [vmem:[%s0 + $0x320] sm:$0xff]
  %v112 = vld [vmem:[%s0 + $0x328] sm:$0xff]
  %v113 = vld [vmem:[%s0 + $0x330] sm:$0xff]
  %v114 = vld [vmem:[%s0 + $0x338] sm:$0xff]
  %v115 = vld [vmem:[%s0 + $0x340] sm:$0xff]
  %v116 = vld [vmem:[%s0 + $0x348] sm:$0xff]
  %v117 = vld [vmem:[%s0 + $0x350] sm:$0xff]
  %v118 = vld [vmem:[%s0 + $0x358] sm:$0xff]
  %v119 = vld [vmem:[%s0 + $0x360] sm:$0xff]
  %v120 = vld [vmem:[%s0 + $0x368] sm:$0xff]
  %v121 = vld [vmem:[%s0 + $0x370] sm:$0xff]
  %v122 = vld [vmem:[%s0 + $0x378] sm:$0xff]
  %v123 = vld [vmem:[%s0 + $0x380] sm:$0xff]
  %v124 = vld [vmem:[%s0 + $0x388] sm:$0xff]
  %v125 = vld [vmem:[%s0 + $0x390] sm:$0xff]
  %v126 = vld [vmem:[%s0 + $0x398] sm:$0xff]
  %v127 = vld [vmem:[%s0 + $0x3a0] sm:$0xff]
  %v128 = vld [vmem:[%s0 + $0x3a8] sm:$0xff]
  %v129 = vld [vmem:[%s0 + $0x3b0] sm:$0xff]
  %v130 = vld [vmem:[%s0 + $0x3b8] sm:$0xff]
  %v131 = vld [vmem:[%s0 + $0x3c0] sm:$0xff]
  %v132 = vld [vmem:[%s0 + $0x3c8] sm:$0xff]
  %v133 = vld [vmem:[%s0 + $0x3d0] sm:$0xff]
  %v134 = vld [vmem:[%s0 + $0x3d8] sm:$0xff]
  %v135 = vld [vmem:[%s0 + $0x3e0] sm:$0xff]
  %v136 = vld [vmem:[%s0 + $0x3e8] sm:$0xff]
  %v137 = vld [vmem:[%s0 + $0x3f0] sm:$0xff]
  %v138 = vld [vmem:[%s0 + $0x3f8] sm:$0xff]
  %v139 = vld [vmem:[%s0 + $0x400] sm:$0x1]
  %v140 = vld [vmem:[%s0 + $0x408] sm:$0x1]
  %v141 = vld [vmem:[%s0 + $0x410] sm:$0xff]
  %v142 = vld [vmem:[%s0 + $0x418] sm:$0xff]
  %v143 = vld [vmem:[%s0 + $0x420] sm:$0xff]
  %v144 = vld [vmem:[%s0 + $0x428] sm:$0xff]
  %v145 = vld [vmem:[%s0 + $0x430] sm:$0xff]
  %v146 = vld [vmem:[%s0 + $0x438] sm:$0xff]
  %v147 = vld [vmem:[%s0 + $0x440] sm:$0xff]
  %v148 = vld [vmem:[%s0 + $0x448] sm:$0xff]
  %v149 = vld [vmem:[%s0 + $0x450] sm:$0xff]
  %v150 = vld [vmem:[%s0 + $0x458] sm:$0xff]
  %v151 = vld [vmem:[%s0 + $0x460] sm:$0xff]
  %v152 = vld [vmem:[%s0 + $0x468] sm:$0xff]
  %v153 = vld [vmem:[%s0 + $0x470] sm:$0xff]
  %v154 = vld [vmem:[%s0 + $0x478] sm:$0xff]
  %v155 = vld [vmem:[%s0 + $0x480] sm:$0xff]
  %v156 = vld [vmem:[%s0 + $0x488] sm:$0xff]
  %v157 = vld [vmem:[%s0 + $0x490] sm:$0xff]
  %v158 = vld [vmem:[%s0 + $0x498] sm:$0xff]
  %v159 = vld [vmem:[%s0 + $0x4a0] sm:$0xff]
  %v160 = vld [vmem:[%s0 + $0x4a8] sm:$0xff]
  %v161 = vld [vmem:[%s0 + $0x4b0] sm:$0xff]
  %v162 = vld [vmem:[%s0 + $0x4b8] sm:$0xff]
  %v163 = vld [vmem:[%s0 + $0x4c0] sm:$0xff]
  %v164 = vld [vmem:[%s0 + $0x4c8] sm:$0xff]
  %v165 = vld [vmem:[%s0 + $0x4d0] sm:$0xff]
  %v166 = vld [vmem:[%s0 + $0x4d8] sm:$0xff]
  %v167 = vld [vmem:[%s0 + $0x4e0] sm:$0xff]
  %v168 = vld [vmem:[%s0 + $0x4e8] sm:$0xff]
  %v169 = vld [vmem:[%s0 + $0x4f0] sm:$0xff]
  %v170 = vld [vmem:[%s0 + $0x4f8] sm:$0xff]
  %v171 = vld [vmem:[%s0 + $0x500] sm:$0xff]
  %v172 = vld [vmem:[%s0 + $0x508] sm:$0xff]
  %v173 = vld [vmem:[%s0 + $0x510] sm:$0xff]
  %v174 = vld [vmem:[%s0 + $0x518] sm:$0xff]
  %v175 = vld [vmem:[%s0 + $0x520] sm:$0xff]
  %v176 = vld [vmem:[%s0 + $0x528] sm:$0xff]
  %v177 = vld [vmem:[%s0 + $0x530] sm:$0xff]
  %v178 = vld [vmem:[%s0 + $0x538] sm:$0xff]
  %v179 = vld [vmem:[%s0 + $0x540] sm:$0xff]
  %v180 = vld [vmem:[%s0 + $0x548] sm:$0xff]
  %v181 = vld [vmem:[%s0 + $0x550] sm:$0xff]
  %v182 = vld [vmem:[%s0 + $0x558] sm:$0xff]
  %v183 = vld [vmem:[%s0 + $0x560] sm:$0xff]
  %v184 = vld [vmem:[%s0 + $0x568] sm:$0xff]
  %v185 = vld [vmem:[%s0 + $0x570] sm:$0xff]
  %v186 = vld [vmem:[%s0 + $0x578] sm:$0xff]
  %v187 = vld [vmem:[%s0 + $0x580] sm:$0xff]
  %v188 = vld [vmem:[%s0 + $0x588] sm:$0xff]
  %v189 = vld [vmem:[%s0 + $0x590] sm:$0xff]
  %v190 = vld [vmem:[%s0 + $0x598] sm:$0xff]
  %v191 = vld [vmem:[%s0 + $0x5a0] sm:$0xff]
  %v192 = vld [vmem:[%s0 + $0x5a8] sm:$0xff]
  %v193 = vld [vmem:[%s0 + $0x5b0] sm:$0xff]
  %v194 = vld [vmem:[%s0 + $0x5b8] sm:$0xff]
  %v195 = vld [vmem:[%s0 + $0x5c0] sm:$0xff]
  %v196 = vld [vmem:[%s0 + $0x5c8] sm:$0xff]
  %v197 = vld [vmem:[%s0 + $0x5d0] sm:$0xff]
  %v198 = vld [vmem:[%s0 + $0x5d8] sm:$0xff]
  %v199 = vld [vmem:[%s0 + $0x5e0] sm:$0xff]
  %v200 = vld [vmem:[%s0 + $0x5e8] sm:$0xff]
  %v201 = vld [vmem:[%s0 + $0x5f0] sm:$0xff]
  %v202 = vld [vmem:[%s0 + $0x5f8] sm:$0xff]
  %v203 = vld [vmem:[%s0 + $0x600] sm:$0xff]
  %v204 = vld [vmem:[%s0 + $0x608] sm:$0xff]
  %v205 = vld [vmem:[%s0 + $0x610] sm:$0xff]
  %v206 = vld [vmem:[%s0 + $0x618] sm:$0xff]
  %v207 = vld [vmem:[%s0 + $0x620] sm:$0xff]
  %v208 = vld [vmem:[%s0 + $0x628] sm:$0xff]
  %v209 = vld [vmem:[%s0 + $0x630] sm:$0xff]
  %v210 = vld [vmem:[%s0 + $0x638] sm:$0xff]
  %v211 = vld [vmem:[%s0 + $0x640] sm:$0xff]
  %v212 = vld [vmem:[%s0 + $0x648] sm:$0xff]
  %v213 = vld [vmem:[%s0 + $0x650] sm:$0xff]
  %v214 = vld [vmem:[%s0 + $0x658] sm:$0xff]
  %v215 = vld [vmem:[%s0 + $0x660] sm:$0xff]
  %v216 = vld [vmem:[%s0 + $0x668] sm:$0xff]
  %v217 = vld [vmem:[%s0 + $0x670] sm:$0xff]
  %v218 = vld [vmem:[%s0 + $0x678] sm:$0xff]
  %v219 = vld [vmem:[%s0 + $0x680] sm:$0xff]
  %v220 = vld [vmem:[%s0 + $0x688] sm:$0xff]
  %v221 = vld [vmem:[%s0 + $0x690] sm:$0xff]
  %v222 = vld [vmem:[%s0 + $0x698] sm:$0xff]
  %v223 = vld [vmem:[%s0 + $0x6a0] sm:$0xff]
  %v224 = vld [vmem:[%s0 + $0x6a8] sm:$0xff]
  %v225 = vld [vmem:[%s0 + $0x6b0] sm:$0xff]
  %v226 = vld [vmem:[%s0 + $0x6b8] sm:$0xff]
  %v227 = vld [vmem:[%s0 + $0x6c0] sm:$0xff]
  %v228 = vld [vmem:[%s0 + $0x6c8] sm:$0xff]
  %v229 = vld [vmem:[%s0 + $0x6d0] sm:$0xff]
  %v230 = vld [vmem:[%s0 + $0x6d8] sm:$0xff]
  %v231 = vld [vmem:[%s0 + $0x6e0] sm:$0xff]
  %v232 = vld [vmem:[%s0 + $0x6e8] sm:$0xff]
  %v233 = vld [vmem:[%s0 + $0x6f0] sm:$0xff]
  %v234 = vld [vmem:[%s0 + $0x6f8] sm:$0xff]
  %v235 = vld [vmem:[%s0 + $0x700] sm:$0xff]
  %v236 = vld [vmem:[%s0 + $0x708] sm:$0xff]
  %v237 = vld [vmem:[%s0 + $0x710] sm:$0xff]
  %v238 = vld [vmem:[%s0 + $0x718] sm:$0xff]
  %v239 = vld [vmem:[%s0 + $0x720] sm:$0xff]
  %v240 = vld [vmem:[%s0 + $0x728] sm:$0xff]
  %v241 = vld [vmem:[%s0 + $0x730] sm:$0xff]
  %v242 = vld [vmem:[%s0 + $0x738] sm:$0xff]
  %v243 = vld [vmem:[%s0 + $0x740] sm:$0xff]
  %v244 = vld [vmem:[%s0 + $0x748] sm:$0xff]
  %v245 = vld [vmem:[%s0 + $0x750] sm:$0xff]
  %v246 = vld [vmem:[%s0 + $0x758] sm:$0xff]
  %v247 = vld [vmem:[%s0 + $0x760] sm:$0xff]
  %v248 = vld [vmem:[%s0 + $0x768] sm:$0xff]
  %v249 = vld [vmem:[%s0 + $0x770] sm:$0xff]
  %v250 = vld [vmem:[%s0 + $0x778] sm:$0xff]
  %v251 = vld [vmem:[%s0 + $0x780] sm:$0xff]
  %v252 = vld [vmem:[%s0 + $0x788] sm:$0xff]
  %v253 = vld [vmem:[%s0 + $0x790] sm:$0xff]
  %v254 = vld [vmem:[%s0 + $0x798] sm:$0xff]
  %v255 = vld [vmem:[%s0 + $0x7a0] sm:$0xff]
  %v256 = vld [vmem:[%s0 + $0x7a8] sm:$0xff]
  %v257 = vld [vmem:[%s0 + $0x7b0] sm:$0xff]
  %v258 = vld [vmem:[%s0 + $0x7b8] sm:$0xff]
  %v259 = vld [vmem:[%s0 + $0x7c0] sm:$0xff]
  %v260 = vld [vmem:[%s0 + $0x7c8] sm:$0xff]
  %v261 = vld [vmem:[%s0 + $0x7d0] sm:$0xff]
  %v262 = vld [vmem:[%s0 + $0x7d8] sm:$0xff]
  %v263 = vld [vmem:[%s0 + $0x7e0] sm:$0xff]
  %v264 = vld [vmem:[%s0 + $0x7e8] sm:$0xff]
  %v265 = vld [vmem:[%s0 + $0x7f0] sm:$0xff]
  %v266 = vld [vmem:[%s0 + $0x7f8] sm:$0xff]
  %v267 = vld [vmem:[%s0 + $0x800] sm:$0xff]
  %v268 = vld [vmem:[%s0 + $0x808] sm:$0xff]
  %v269 = vld [vmem:[%s0 + $0x810] sm:$0x1]
  %v270 = vld [vmem:[%s0 + $0x818] sm:$0x1]
  %v271 = vld [vmem:[%s1] sm:$0xff]
  %v272 = vld [vmem:[%s1 + $0x8] sm:$0xff]
  %v273 = vld [vmem:[%s1 + $0x10] sm:$0xff]
  %v274 = vld [vmem:[%s1 + $0x18] sm:$0xff]
  %v275 = vld [vmem:[%s1 + $0x20] sm:$0xff]
  %v276 = vld [vmem:[%s1 + $0x28] sm:$0xff]
  %v277 = vld [vmem:[%s1 + $0x30] sm:$0xff]
  %v278 = vld [vmem:[%s1 + $0x38] sm:$0xff]
  %v279 = vld [vmem:[%s1 + $0x40] sm:$0xff]
  %v280 = vld [vmem:[%s1 + $0x48] sm:$0xff]
  %v281 = vld [vmem:[%s1 + $0x50] sm:$0xff]
  %v282 = vld [vmem:[%s1 + $0x58] sm:$0xff]
  %v283 = vld [vmem:[%s1 + $0x60] sm:$0xff]
  %v284 = vld [vmem:[%s1 + $0x68] sm:$0xff]
  %v285 = vld [vmem:[%s1 + $0x70] sm:$0xff]
  %v286 = vld [vmem:[%s1 + $0x78] sm:$0xff]
  %v287 = vld [vmem:[%s1 + $0x80] sm:$0xff]
  %v288 = vld [vmem:[%s1 + $0x88] sm:$0xff]
  %v289 = vld [vmem:[%s1 + $0x90] sm:$0xff]
  %v290 = vld [vmem:[%s1 + $0x98] sm:$0xff]
  %v291 = vld [vmem:[%s1 + $0xa0] sm:$0xff]
  %v292 = vld [vmem:[%s1 + $0xa8] sm:$0xff]
  %v293 = vld [vmem:[%s1 + $0xb0] sm:$0xff]
  %v294 = vld [vmem:[%s1 + $0xb8] sm:$0xff]
  %v295 = vld [vmem:[%s1 + $0xc0] sm:$0xff]
  %v296 = vld [vmem:[%s1 + $0xc8] sm:$0xff]
  %v297 = vld [vmem:[%s1 + $0xd0] sm:$0xff]
  %v298 = vld [vmem:[%s1 + $0xd8] sm:$0xff]
  %v299 = vld [vmem:[%s1 + $0xe0] sm:$0xff]
  %v300 = vld [vmem:[%s1 + $0xe8] sm:$0xff]
  %v301 = vld [vmem:[%s1 + $0xf0] sm:$0xff]
  %v302 = vld [vmem:[%s1 + $0xf8] sm:$0xff]
  %v303 = vld [vmem:[%s1 + $0x100] sm:$0xff]
  %v304 = vld [vmem:[%s1 + $0x108] sm:$0xff]
  %v305 = vld [vmem:[%s1 + $0x110] sm:$0xff]
  %v306 = vld [vmem:[%s1 + $0x118] sm:$0xff]
  %v307 = vld [vmem:[%s1 + $0x120] sm:$0xff]
  %v308 = vld [vmem:[%s1 + $0x128] sm:$0xff]
  %v309 = vld [vmem:[%s1 + $0x130] sm:$0xff]
  %v310 = vld [vmem:[%s1 + $0x138] sm:$0xff]
  %v311 = vld [vmem:[%s1 + $0x140] sm:$0xff]
  %v312 = vld [vmem:[%s1 + $0x148] sm:$0xff]
  %v313 = vld [vmem:[%s1 + $0x150] sm:$0xff]
  %v314 = vld [vmem:[%s1 + $0x158] sm:$0xff]
  %v315 = vld [vmem:[%s1 + $0x160] sm:$0xff]
  %v316 = vld [vmem:[%s1 + $0x168] sm:$0xff]
  %v317 = vld [vmem:[%s1 + $0x170] sm:$0xff]
  %v318 = vld [vmem:[%s1 + $0x178] sm:$0xff]
  %v319 = vld [vmem:[%s1 + $0x180] sm:$0xff]
  %v320 = vld [vmem:[%s1 + $0x188] sm:$0xff]
  %v321 = vld [vmem:[%s1 + $0x190] sm:$0xff]
  %v322 = vld [vmem:[%s1 + $0x198] sm:$0xff]
  %v323 = vld [vmem:[%s1 + $0x1a0] sm:$0xff]
  %v324 = vld [vmem:[%s1 + $0x1a8] sm:$0xff]
  %v325 = vld [vmem:[%s1 + $0x1b0] sm:$0xff]
  %v326 = vld [vmem:[%s1 + $0x1b8] sm:$0xff]
  %v327 = vld [vmem:[%s1 + $0x1c0] sm:$0xff]
  %v328 = vld [vmem:[%s1 + $0x1c8] sm:$0xff]
  %v329 = vld [vmem:[%s1 + $0x1d0] sm:$0xff]
  %v330 = vld [vmem:[%s1 + $0x1d8] sm:$0xff]
  %v331 = vld [vmem:[%s1 + $0x1e0] sm:$0xff]
  %v332 = vld [vmem:[%s1 + $0x1e8] sm:$0xff]
  %v333 = vld [vmem:[%s1 + $0x1f0] sm:$0xff]
  %v334 = vld [vmem:[%s1 + $0x1f8] sm:$0xff]
  %v335 = vld [vmem:[%s1 + $0x200] sm:$0xff]
  %v336 = vld [vmem:[%s1 + $0x208] sm:$0xff]
  %v337 = vld [vmem:[%s1 + $0x210] sm:$0xff]
  %v338 = vld [vmem:[%s1 + $0x218] sm:$0xff]
  %v339 = vld [vmem:[%s1 + $0x220] sm:$0xff]
  %v340 = vld [vmem:[%s1 + $0x228] sm:$0xff]
  %v341 = vld [vmem:[%s1 + $0x230] sm:$0xff]
  %v342 = vld [vmem:[%s1 + $0x238] sm:$0xff]
  %v343 = vld [vmem:[%s1 + $0x240] sm:$0xff]
  %v344 = vld [vmem:[%s1 + $0x248] sm:$0xff]
  %v345 = vld [vmem:[%s1 + $0x250] sm:$0xff]
  %v346 = vld [vmem:[%s1 + $0x258] sm:$0xff]
  %v347 = vld [vmem:[%s1 + $0x260] sm:$0xff]
  %v348 = vld [vmem:[%s1 + $0x268] sm:$0xff]
  %v349 = vld [vmem:[%s1 + $0x270] sm:$0xff]
  %v350 = vld [vmem:[%s1 + $0x278] sm:$0xff]
  %v351 = vld [vmem:[%s1 + $0x280] sm:$0xff]
  %v352 = vld [vmem:[%s1 + $0x288] sm:$0xff]
  %v353 = vld [vmem:[%s1 + $0x290] sm:$0xff]
  %v354 = vld [vmem:[%s1 + $0x298] sm:$0xff]
  %v355 = vld [vmem:[%s1 + $0x2a0] sm:$0xff]
  %v356 = vld [vmem:[%s1 + $0x2a8] sm:$0xff]
  %v357 = vld [vmem:[%s1 + $0x2b0] sm:$0xff]
  %v358 = vld [vmem:[%s1 + $0x2b8] sm:$0xff]
  %v359 = vld [vmem:[%s1 + $0x2c0] sm:$0xff]
  %v360 = vld [vmem:[%s1 + $0x2c8] sm:$0xff]
  %v361 = vld [vmem:[%s1 + $0x2d0] sm:$0xff]
  %v362 = vld [vmem:[%s1 + $0x2d8] sm:$0xff]
  %v363 = vld [vmem:[%s1 + $0x2e0] sm:$0xff]
  %v364 = vld [vmem:[%s1 + $0x2e8] sm:$0xff]
  %v365 = vld [vmem:[%s1 + $0x2f0] sm:$0xff]
  %v366 = vld [vmem:[%s1 + $0x2f8] sm:$0xff]
  %v367 = vld [vmem:[%s1 + $0x300] sm:$0xff]
  %v368 = vld [vmem:[%s1 + $0x308] sm:$0xff]
  %v369 = vld [vmem:[%s1 + $0x310] sm:$0xff]
  %v370 = vld [vmem:[%s1 + $0x318] sm:$0xff]
  %v371 = vld [vmem:[%s1 + $0x320] sm:$0xff]
  %v372 = vld [vmem:[%s1 + $0x328] sm:$0xff]
  %v373 = vld [vmem:[%s1 + $0x330] sm:$0xff]
  %v374 = vld [vmem:[%s1 + $0x338] sm:$0xff]
  %v375 = vld [vmem:[%s1 + $0x340] sm:$0xff]
  %v376 = vld [vmem:[%s1 + $0x348] sm:$0xff]
  %v377 = vld [vmem:[%s1 + $0x350] sm:$0xff]
  %v378 = vld [vmem:[%s1 + $0x358] sm:$0xff]
  %v379 = vld [vmem:[%s1 + $0x360] sm:$0xff]
  %v380 = vld [vmem:[%s1 + $0x368] sm:$0xff]
  %v381 = vld [vmem:[%s1 + $0x370] sm:$0xff]
  %v382 = vld [vmem:[%s1 + $0x378] sm:$0xff]
  %v383 = vld [vmem:[%s1 + $0x380] sm:$0xff]
  %v384 = vld [vmem:[%s1 + $0x388] sm:$0xff]
  %v385 = vld [vmem:[%s1 + $0x390] sm:$0xff]
  %v386 = vld [vmem:[%s1 + $0x398] sm:$0xff]
  %v387 = vld [vmem:[%s1 + $0x3a0] sm:$0xff]
  %v388 = vld [vmem:[%s1 + $0x3a8] sm:$0xff]
  %v389 = vld [vmem:[%s1 + $0x3b0] sm:$0xff]
  %v390 = vld [vmem:[%s1 + $0x3b8] sm:$0xff]
  %v391 = vld [vmem:[%s1 + $0x3c0] sm:$0xff]
  %v392 = vld [vmem:[%s1 + $0x3c8] sm:$0xff]
  %v393 = vld [vmem:[%s1 + $0x3d0] sm:$0xff]
  %v394 = vld [vmem:[%s1 + $0x3d8] sm:$0xff]
  %v395 = vld [vmem:[%s1 + $0x3e0] sm:$0xff]
  %v396 = vld [vmem:[%s1 + $0x3e8] sm:$0xff]
  %v397 = vld [vmem:[%s1 + $0x3f0] sm:$0xff]
  %v398 = vld [vmem:[%s1 + $0x3f8] sm:$0xff]
  %v399 = vld [vmem:[%s1 + $0x400] sm:$0x1]
  %v400 = vld [vmem:[%s1 + $0x408] sm:$0x1]
  %v401 = vadd.f32 %v11, %v271
  %v402 = vadd.f32 %v12, %v272
  %v403 = vadd.f32 %v13, %v273
  %v404 = vadd.f32 %v14, %v274
  %v405 = vadd.f32 %v15, %v275
  %v406 = vadd.f32 %v16, %v276
  %v407 = vadd.f32 %v17, %v277
  %v408 = vadd.f32 %v18, %v278
  %v409 = vadd.f32 %v19, %v279
  %v410 = vadd.f32 %v20, %v280
  %v411 = vadd.f32 %v21, %v281
  %v412 = vadd.f32 %v22, %v282
  %v413 = vadd.f32 %v23, %v283
  %v414 = vadd.f32 %v24, %v284
  %v415 = vadd.f32 %v25, %v285
  %v416 = vadd.f32 %v26, %v286
  %v417 = vadd.f32 %v27, %v287
  %v418 = vadd.f32 %v28, %v288
  %v419 = vadd.f32 %v29, %v289
  %v420 = vadd.f32 %v30, %v290
  %v421 = vadd.f32 %v31, %v291
  %v422 = vadd.f32 %v32, %v292
  %v423 = vadd.f32 %v33, %v293
  %v424 = vadd.f32 %v34, %v294
  %v425 = vadd.f32 %v35, %v295
  %v426 = vadd.f32 %v36, %v296
  %v427 = vadd.f32 %v37, %v297
  %v428 = vadd.f32 %v38, %v298
  %v429 = vadd.f32 %v39, %v299
  %v430 = vadd.f32 %v40, %v300
  %v431 = vadd.f32 %v41, %v301
  %v432 = vadd.f32 %v42, %v302
  %v433 = vadd.f32 %v43, %v303
  %v434 = vadd.f32 %v44, %v304
  %v435 = vadd.f32 %v45, %v305
  %v436 = vadd.f32 %v46, %v306
  %v437 = vadd.f32 %v47, %v307
  %v438 = vadd.f32 %v48, %v308
  %v439 = vadd.f32 %v49, %v309
  %v440 = vadd.f32 %v50, %v310
  %v441 = vadd.f32 %v51, %v311
  %v442 = vadd.f32 %v52, %v312
  %v443 = vadd.f32 %v53, %v313
  %v444 = vadd.f32 %v54, %v314
  %v445 = vadd.f32 %v55, %v315
  %v446 = vadd.f32 %v56, %v316
  %v447 = vadd.f32 %v57, %v317
  %v448 = vadd.f32 %v58, %v318
  %v449 = vadd.f32 %v59, %v319
  %v450 = vadd.f32 %v60, %v320
  %v451 = vadd.f32 %v61, %v321
  %v452 = vadd.f32 %v62, %v322
  %v453 = vadd.f32 %v63, %v323
  %v454 = vadd.f32 %v64, %v324
  %v455 = vadd.f32 %v65, %v325
  %v456 = vadd.f32 %v66, %v326
  %v457 = vadd.f32 %v67, %v327
  %v458 = vadd.f32 %v68, %v328
  %v459 = vadd.f32 %v69, %v329
  %v460 = vadd.f32 %v70, %v330
  %v461 = vadd.f32 %v71, %v331
  %v462 = vadd.f32 %v72, %v332
  %v463 = vadd.f32 %v73, %v333
  %v464 = vadd.f32 %v74, %v334
  %v465 = vadd.f32 %v75, %v335
  %v466 = vadd.f32 %v76, %v336
  %v467 = vadd.f32 %v77, %v337
  %v468 = vadd.f32 %v78, %v338
  %v469 = vadd.f32 %v79, %v339
  %v470 = vadd.f32 %v80, %v340
  %v471 = vadd.f32 %v81, %v341
  %v472 = vadd.f32 %v82, %v342
  %v473 = vadd.f32 %v83, %v343
  %v474 = vadd.f32 %v84, %v344
  %v475 = vadd.f32 %v85, %v345
  %v476 = vadd.f32 %v86, %v346
  %v477 = vadd.f32 %v87, %v347
  %v478 = vadd.f32 %v88, %v348
  %v479 = vadd.f32 %v89, %v349
  %v480 = vadd.f32 %v90, %v350
  %v481 = vadd.f32 %v91, %v351
  %v482 = vadd.f32 %v92, %v352
  %v483 = vadd.f32 %v93, %v353
  %v484 = vadd.f32 %v94, %v354
  %v485 = vadd.f32 %v95, %v355
  %v486 = vadd.f32 %v96, %v356
  %v487 = vadd.f32 %v97, %v357
  %v488 = vadd.f32 %v98, %v358
  %v489 = vadd.f32 %v99, %v359
  %v490 = vadd.f32 %v100, %v360
  %v491 = vadd.f32 %v101, %v361
  %v492 = vadd.f32 %v102, %v362
  %v493 = vadd.f32 %v103, %v363
  %v494 = vadd.f32 %v104, %v364
  %v495 = vadd.f32 %v105, %v365
  %v496 = vadd.f32 %v106, %v366
  %v497 = vadd.f32 %v107, %v367
  %v498 = vadd.f32 %v108, %v368
  %v499 = vadd.f32 %v109, %v369
  %v500 = vadd.f32 %v110, %v370
  %v501 = vadd.f32 %v111, %v371
  %v502 = vadd.f32 %v112, %v372
  %v503 = vadd.f32 %v113, %v373
  %v504 = vadd.f32 %v114, %v374
  %v505 = vadd.f32 %v115, %v375
  %v506 = vadd.f32 %v116, %v376
  %v507 = vadd.f32 %v117, %v377
  %v508 = vadd.f32 %v118, %v378
  %v509 = vadd.f32 %v119, %v379
  %v510 = vadd.f32 %v120, %v380
  %v511 = vadd.f32 %v121, %v381
  %v512 = vadd.f32 %v122, %v382
  %v513 = vadd.f32 %v123, %v383
  %v514 = vadd.f32 %v124, %v384
  %v515 = vadd.f32 %v125, %v385
  %v516 = vadd.f32 %v126, %v386
  %v517 = vadd.f32 %v127, %v387
  %v518 = vadd.f32 %v128, %v388
  %v519 = vadd.f32 %v129, %v389
  %v520 = vadd.f32 %v130, %v390
  %v521 = vadd.f32 %v131, %v391
  %v522 = vadd.f32 %v132, %v392
  %v523 = vadd.f32 %v133, %v393
  %v524 = vadd.f32 %v134, %v394
  %v525 = vadd.f32 %v135, %v395
  %v526 = vadd.f32 %v136, %v396
  %v527 = vadd.f32 %v137, %v397
  %v528 = vadd.f32 %v138, %v398
  %v529 = vadd.f32 %v139, %v399
  %v530 = vadd.f32 %v140, %v400
  %v531 = vadd.f32 %v141, %v271
  %v532 = vadd.f32 %v142, %v272
  %v533 = vadd.f32 %v143, %v273
  %v534 = vadd.f32 %v144, %v274
  %v535 = vadd.f32 %v145, %v275
  %v536 = vadd.f32 %v146, %v276
  %v537 = vadd.f32 %v147, %v277
  %v538 = vadd.f32 %v148, %v278
  %v539 = vadd.f32 %v149, %v279
  %v540 = vadd.f32 %v150, %v280
  %v541 = vadd.f32 %v151, %v281
  %v542 = vadd.f32 %v152, %v282
  %v543 = vadd.f32 %v153, %v283
  %v544 = vadd.f32 %v154, %v284
  %v545 = vadd.f32 %v155, %v285
  %v546 = vadd.f32 %v156, %v286
  %v547 = vadd.f32 %v157, %v287
  %v548 = vadd.f32 %v158, %v288
  %v549 = vadd.f32 %v159, %v289
  %v550 = vadd.f32 %v160, %v290
  %v551 = vadd.f32 %v161, %v291
  %v552 = vadd.f32 %v162, %v292
  %v553 = vadd.f32 %v163, %v293
  %v554 = vadd.f32 %v164, %v294
  %v555 = vadd.f32 %v165, %v295
  %v556 = vadd.f32 %v166, %v296
  %v557 = vadd.f32 %v167, %v297
  %v558 = vadd.f32 %v168, %v298
  %v559 = vadd.f32 %v169, %v299
  %v560 = vadd.f32 %v170, %v300
  %v561 = vadd.f32 %v171, %v301
  %v562 = vadd.f32 %v172, %v302
  %v563 = vadd.f32 %v173, %v303
  %v564 = vadd.f32 %v174, %v304
  %v565 = vadd.f32 %v175, %v305
  %v566 = vadd.f32 %v176, %v306
  %v567 = vadd.f32 %v177, %v307
  %v568 = vadd.f32 %v178, %v308
  %v569 = vadd.f32 %v179, %v309
  %v570 = vadd.f32 %v180, %v310
  %v571 = vadd.f32 %v181, %v311
  %v572 = vadd.f32 %v182, %v312
  %v573 = vadd.f32 %v183, %v313
  %v574 = vadd.f32 %v184, %v314
  %v575 = vadd.f32 %v185, %v315
  %v576 = vadd.f32 %v186, %v316
  %v577 = vadd.f32 %v187, %v317
  %v578 = vadd.f32 %v188, %v318
  %v579 = vadd.f32 %v189, %v319
  %v580 = vadd.f32 %v190, %v320
  %v581 = vadd.f32 %v191, %v321
  %v582 = vadd.f32 %v192, %v322
  %v583 = vadd.f32 %v193, %v323
  %v584 = vadd.f32 %v194, %v324
  %v585 = vadd.f32 %v195, %v325
  %v586 = vadd.f32 %v196, %v326
  %v587 = vadd.f32 %v197, %v327
  %v588 = vadd.f32 %v198, %v328
  %v589 = vadd.f32 %v199, %v329
  %v590 = vadd.f32 %v200, %v330
  %v591 = vadd.f32 %v201, %v331
  %v592 = vadd.f32 %v202, %v332
  %v593 = vadd.f32 %v203, %v333
  %v594 = vadd.f32 %v204, %v334
  %v595 = vadd.f32 %v205, %v335
  %v596 = vadd.f32 %v206, %v336
  %v597 = vadd.f32 %v207, %v337
  %v598 = vadd.f32 %v208, %v338
  %v599 = vadd.f32 %v209, %v339
  %v600 = vadd.f32 %v210, %v340
  %v601 = vadd.f32 %v211, %v341
  %v602 = vadd.f32 %v212, %v342
  %v603 = vadd.f32 %v213, %v343
  %v604 = vadd.f32 %v214, %v344
  %v605 = vadd.f32 %v215, %v345
  %v606 = vadd.f32 %v216, %v346
  %v607 = vadd.f32 %v217, %v347
  %v608 = vadd.f32 %v218, %v348
  %v609 = vadd.f32 %v219, %v349
  %v610 = vadd.f32 %v220, %v350
  %v611 = vadd.f32 %v221, %v351
  %v612 = vadd.f32 %v222, %v352
  %v613 = vadd.f32 %v223, %v353
  %v614 = vadd.f32 %v224, %v354
  %v615 = vadd.f32 %v225, %v355
  %v616 = vadd.f32 %v226, %v356
  %v617 = vadd.f32 %v227, %v357
  %v618 = vadd.f32 %v228, %v358
  %v619 = vadd.f32 %v229, %v359
  %v620 = vadd.f32 %v230, %v360
  %v621 = vadd.f32 %v231, %v361
  %v622 = vadd.f32 %v232, %v362
  %v623 = vadd.f32 %v233, %v363
  %v624 = vadd.f32 %v234, %v364
  %v625 = vadd.f32 %v235, %v365
  %v626 = vadd.f32 %v236, %v366
  %v627 = vadd.f32 %v237, %v367
  %v628 = vadd.f32 %v238, %v368
  %v629 = vadd.f32 %v239, %v369
  %v630 = vadd.f32 %v240, %v370
  %v631 = vadd.f32 %v241, %v371
  %v632 = vadd.f32 %v242, %v372
  %v633 = vadd.f32 %v243, %v373
  %v634 = vadd.f32 %v244, %v374
  %v635 = vadd.f32 %v245, %v375
  %v636 = vadd.f32 %v246, %v376
  %v637 = vadd.f32 %v247, %v377
  %v638 = vadd.f32 %v248, %v378
  %v639 = vadd.f32 %v249, %v379
  %v640 = vadd.f32 %v250, %v380
  %v641 = vadd.f32 %v251, %v381
  %v642 = vadd.f32 %v252, %v382
  %v643 = vadd.f32 %v253, %v383
  %v644 = vadd.f32 %v254, %v384
  %v645 = vadd.f32 %v255, %v385
  %v646 = vadd.f32 %v256, %v386
  %v647 = vadd.f32 %v257, %v387
  %v648 = vadd.f32 %v258, %v388
  %v649 = vadd.f32 %v259, %v389
  %v650 = vadd.f32 %v260, %v390
  %v651 = vadd.f32 %v261, %v391
  %v652 = vadd.f32 %v262, %v392
  %v653 = vadd.f32 %v263, %v393
  %v654 = vadd.f32 %v264, %v394
  %v655 = vadd.f32 %v265, %v395
  %v656 = vadd.f32 %v266, %v396
  %v657 = vadd.f32 %v267, %v397
  %v658 = vadd.f32 %v268, %v398
  %v659 = vadd.f32 %v269, %v399
  %v660 = vadd.f32 %v270, %v400
  %661 = vst [vmem:[%s2] sm:$0xff] %v401
  %vm662 = vcmask 523264
  %663 = vst.msk [vmem:[%s2 + $0x8] sm:$0xff] %vm662, %v402
  %664 = vst [vmem:[%s2 + $0x10] sm:$0xff] %v403
  %665 = vst.msk [vmem:[%s2 + $0x18] sm:$0xff] %vm662, %v404
  %666 = vst [vmem:[%s2 + $0x20] sm:$0xff] %v405
  %667 = vst.msk [vmem:[%s2 + $0x28] sm:$0xff] %vm662, %v406
  %668 = vst [vmem:[%s2 + $0x30] sm:$0xff] %v407
  %669 = vst.msk [vmem:[%s2 + $0x38] sm:$0xff] %vm662, %v408
  %670 = vst [vmem:[%s2 + $0x40] sm:$0xff] %v409
  %671 = vst.msk [vmem:[%s2 + $0x48] sm:$0xff] %vm662, %v410
  %672 = vst [vmem:[%s2 + $0x50] sm:$0xff] %v411
  %673 = vst.msk [vmem:[%s2 + $0x58] sm:$0xff] %vm662, %v412
  %674 = vst [vmem:[%s2 + $0x60] sm:$0xff] %v413
  %675 = vst.msk [vmem:[%s2 + $0x68] sm:$0xff] %vm662, %v414
  %676 = vst [vmem:[%s2 + $0x70] sm:$0xff] %v415
  %677 = vst.msk [vmem:[%s2 + $0x78] sm:$0xff] %vm662, %v416
  %678 = vst [vmem:[%s2 + $0x80] sm:$0xff] %v417
  %679 = vst.msk [vmem:[%s2 + $0x88] sm:$0xff] %vm662, %v418
  %680 = vst [vmem:[%s2 + $0x90] sm:$0xff] %v419
  %681 = vst.msk [vmem:[%s2 + $0x98] sm:$0xff] %vm662, %v420
  %682 = vst [vmem:[%s2 + $0xa0] sm:$0xff] %v421
  %683 = vst.msk [vmem:[%s2 + $0xa8] sm:$0xff] %vm662, %v422
  %684 = vst [vmem:[%s2 + $0xb0] sm:$0xff] %v423
  %685 = vst.msk [vmem:[%s2 + $0xb8] sm:$0xff] %vm662, %v424
  %686 = vst [vmem:[%s2 + $0xc0] sm:$0xff] %v425
  %687 = vst.msk [vmem:[%s2 + $0xc8] sm:$0xff] %vm662, %v426
  %688 = vst [vmem:[%s2 + $0xd0] sm:$0xff] %v427
  %689 = vst.msk [vmem:[%s2 + $0xd8] sm:$0xff] %vm662, %v428
  %690 = vst [vmem:[%s2 + $0xe0] sm:$0xff] %v429
  %691 = vst.msk [vmem:[%s2 + $0xe8] sm:$0xff] %vm662, %v430
  %692 = vst [vmem:[%s2 + $0xf0] sm:$0xff] %v431
  %693 = vst.msk [vmem:[%s2 + $0xf8] sm:$0xff] %vm662, %v432
  %694 = vst [vmem:[%s2 + $0x100] sm:$0xff] %v433
  %695 = vst.msk [vmem:[%s2 + $0x108] sm:$0xff] %vm662, %v434
  %696 = vst [vmem:[%s2 + $0x110] sm:$0xff] %v435
  %697 = vst.msk [vmem:[%s2 + $0x118] sm:$0xff] %vm662, %v436
  %698 = vst [vmem:[%s2 + $0x120] sm:$0xff] %v437
  %699 = vst.msk [vmem:[%s2 + $0x128] sm:$0xff] %vm662, %v438
  %700 = vst [vmem:[%s2 + $0x130] sm:$0xff] %v439
  %701 = vst.msk [vmem:[%s2 + $0x138] sm:$0xff] %vm662, %v440
  %702 = vst [vmem:[%s2 + $0x140] sm:$0xff] %v441
  %703 = vst.msk [vmem:[%s2 + $0x148] sm:$0xff] %vm662, %v442
  %704 = vst [vmem:[%s2 + $0x150] sm:$0xff] %v443
  %705 = vst.msk [vmem:[%s2 + $0x158] sm:$0xff] %vm662, %v444
  %706 = vst [vmem:[%s2 + $0x160] sm:$0xff] %v445
  %707 = vst.msk [vmem:[%s2 + $0x168] sm:$0xff] %vm662, %v446
  %708 = vst [vmem:[%s2 + $0x170] sm:$0xff] %v447
  %709 = vst.msk [vmem:[%s2 + $0x178] sm:$0xff] %vm662, %v448
  %710 = vst [vmem:[%s2 + $0x180] sm:$0xff] %v449
  %711 = vst.msk [vmem:[%s2 + $0x188] sm:$0xff] %vm662, %v450
  %712 = vst [vmem:[%s2 + $0x190] sm:$0xff] %v451
  %713 = vst.msk [vmem:[%s2 + $0x198] sm:$0xff] %vm662, %v452
  %714 = vst [vmem:[%s2 + $0x1a0] sm:$0xff] %v453
  %715 = vst.msk [vmem:[%s2 + $0x1a8] sm:$0xff] %vm662, %v454
  %716 = vst [vmem:[%s2 + $0x1b0] sm:$0xff] %v455
  %717 = vst.msk [vmem:[%s2 + $0x1b8] sm:$0xff] %vm662, %v456
  %718 = vst [vmem:[%s2 + $0x1c0] sm:$0xff] %v457
  %719 = vst.msk [vmem:[%s2 + $0x1c8] sm:$0xff] %vm662, %v458
  %720 = vst [vmem:[%s2 + $0x1d0] sm:$0xff] %v459
  %721 = vst.msk [vmem:[%s2 + $0x1d8] sm:$0xff] %vm662, %v460
  %722 = vst [vmem:[%s2 + $0x1e0] sm:$0xff] %v461
  %723 = vst.msk [vmem:[%s2 + $0x1e8] sm:$0xff] %vm662, %v462
  %724 = vst [vmem:[%s2 + $0x1f0] sm:$0xff] %v463
  %725 = vst.msk [vmem:[%s2 + $0x1f8] sm:$0xff] %vm662, %v464
  %726 = vst [vmem:[%s2 + $0x200] sm:$0xff] %v465
  %727 = vst.msk [vmem:[%s2 + $0x208] sm:$0xff] %vm662, %v466
  %728 = vst [vmem:[%s2 + $0x210] sm:$0xff] %v467
  %729 = vst.msk [vmem:[%s2 + $0x218] sm:$0xff] %vm662, %v468
  %730 = vst [vmem:[%s2 + $0x220] sm:$0xff] %v469
  %731 = vst.msk [vmem:[%s2 + $0x228] sm:$0xff] %vm662, %v470
  %732 = vst [vmem:[%s2 + $0x230] sm:$0xff] %v471
  %733 = vst.msk [vmem:[%s2 + $0x238] sm:$0xff] %vm662, %v472
  %734 = vst [vmem:[%s2 + $0x240] sm:$0xff] %v473
  %735 = vst.msk [vmem:[%s2 + $0x248] sm:$0xff] %vm662, %v474
  %736 = vst [vmem:[%s2 + $0x250] sm:$0xff] %v475
  %737 = vst.msk [vmem:[%s2 + $0x258] sm:$0xff] %vm662, %v476
  %738 = vst [vmem:[%s2 + $0x260] sm:$0xff] %v477
  %739 = vst.msk [vmem:[%s2 + $0x268] sm:$0xff] %vm662, %v478
  %740 = vst [vmem:[%s2 + $0x270] sm:$0xff] %v479
  %741 = vst.msk [vmem:[%s2 + $0x278] sm:$0xff] %vm662, %v480
  %742 = vst [vmem:[%s2 + $0x280] sm:$0xff] %v481
  %743 = vst.msk [vmem:[%s2 + $0x288] sm:$0xff] %vm662, %v482
  %744 = vst [vmem:[%s2 + $0x290] sm:$0xff] %v483
  %745 = vst.msk [vmem:[%s2 + $0x298] sm:$0xff] %vm662, %v484
  %746 = vst [vmem:[%s2 + $0x2a0] sm:$0xff] %v485
  %747 = vst.msk [vmem:[%s2 + $0x2a8] sm:$0xff] %vm662, %v486
  %748 = vst [vmem:[%s2 + $0x2b0] sm:$0xff] %v487
  %749 = vst.msk [vmem:[%s2 + $0x2b8] sm:$0xff] %vm662, %v488
  %750 = vst [vmem:[%s2 + $0x2c0] sm:$0xff] %v489
  %751 = vst.msk [vmem:[%s2 + $0x2c8] sm:$0xff] %vm662, %v490
  %752 = vst [vmem:[%s2 + $0x2d0] sm:$0xff] %v491
  %753 = vst.msk [vmem:[%s2 + $0x2d8] sm:$0xff] %vm662, %v492
  %754 = vst [vmem:[%s2 + $0x2e0] sm:$0xff] %v493
  %755 = vst.msk [vmem:[%s2 + $0x2e8] sm:$0xff] %vm662, %v494
  %756 = vst [vmem:[%s2 + $0x2f0] sm:$0xff] %v495
  %757 = vst.msk [vmem:[%s2 + $0x2f8] sm:$0xff] %vm662, %v496
  %758 = vst [vmem:[%s2 + $0x300] sm:$0xff] %v497
  %759 = vst.msk [vmem:[%s2 + $0x308] sm:$0xff] %vm662, %v498
  %760 = vst [vmem:[%s2 + $0x310] sm:$0xff] %v499
  %761 = vst.msk [vmem:[%s2 + $0x318] sm:$0xff] %vm662, %v500
  %762 = vst [vmem:[%s2 + $0x320] sm:$0xff] %v501
  %763 = vst.msk [vmem:[%s2 + $0x328] sm:$0xff] %vm662, %v502
  %764 = vst [vmem:[%s2 + $0x330] sm:$0xff] %v503
  %765 = vst.msk [vmem:[%s2 + $0x338] sm:$0xff] %vm662, %v504
  %766 = vst [vmem:[%s2 + $0x340] sm:$0xff] %v505
  %767 = vst.msk [vmem:[%s2 + $0x348] sm:$0xff] %vm662, %v506
  %768 = vst [vmem:[%s2 + $0x350] sm:$0xff] %v507
  %769 = vst.msk [vmem:[%s2 + $0x358] sm:$0xff] %vm662, %v508
  %770 = vst [vmem:[%s2 + $0x360] sm:$0xff] %v509
  %771 = vst.msk [vmem:[%s2 + $0x368] sm:$0xff] %vm662, %v510
  %772 = vst [vmem:[%s2 + $0x370] sm:$0xff] %v511
  %773 = vst.msk [vmem:[%s2 + $0x378] sm:$0xff] %vm662, %v512
  %774 = vst [vmem:[%s2 + $0x380] sm:$0xff] %v513
  %775 = vst.msk [vmem:[%s2 + $0x388] sm:$0xff] %vm662, %v514
  %776 = vst [vmem:[%s2 + $0x390] sm:$0xff] %v515
  %777 = vst.msk [vmem:[%s2 + $0x398] sm:$0xff] %vm662, %v516
  %778 = vst [vmem:[%s2 + $0x3a0] sm:$0xff] %v517
  %779 = vst.msk [vmem:[%s2 + $0x3a8] sm:$0xff] %vm662, %v518
  %780 = vst [vmem:[%s2 + $0x3b0] sm:$0xff] %v519
  %781 = vst.msk [vmem:[%s2 + $0x3b8] sm:$0xff] %vm662, %v520
  %782 = vst [vmem:[%s2 + $0x3c0] sm:$0xff] %v521
  %783 = vst.msk [vmem:[%s2 + $0x3c8] sm:$0xff] %vm662, %v522
  %784 = vst [vmem:[%s2 + $0x3d0] sm:$0xff] %v523
  %785 = vst.msk [vmem:[%s2 + $0x3d8] sm:$0xff] %vm662, %v524
  %786 = vst [vmem:[%s2 + $0x3e0] sm:$0xff] %v525
  %787 = vst.msk [vmem:[%s2 + $0x3e8] sm:$0xff] %vm662, %v526
  %788 = vst [vmem:[%s2 + $0x3f0] sm:$0xff] %v527
  %789 = vst.msk [vmem:[%s2 + $0x3f8] sm:$0xff] %vm662, %v528
  %790 = vst [vmem:[%s2 + $0x400] sm:$0x1] %v529
  %vm791 = vcmask 516096
  %792 = vst.msk [vmem:[%s2 + $0x408] sm:$0x1] %vm791, %v530
  %793 = vst [vmem:[%s2 + $0x410] sm:$0xff] %v531
  %794 = vst.msk [vmem:[%s2 + $0x418] sm:$0xff] %vm662, %v532
  %795 = vst [vmem:[%s2 + $0x420] sm:$0xff] %v533
  %796 = vst.msk [vmem:[%s2 + $0x428] sm:$0xff] %vm662, %v534
  %797 = vst [vmem:[%s2 + $0x430] sm:$0xff] %v535
  %798 = vst.msk [vmem:[%s2 + $0x438] sm:$0xff] %vm662, %v536
  %799 = vst [vmem:[%s2 + $0x440] sm:$0xff] %v537
  %800 = vst.msk [vmem:[%s2 + $0x448] sm:$0xff] %vm662, %v538
  %801 = vst [vmem:[%s2 + $0x450] sm:$0xff] %v539
  %802 = vst.msk [vmem:[%s2 + $0x458] sm:$0xff] %vm662, %v540
  %803 = vst [vmem:[%s2 + $0x460] sm:$0xff] %v541
  %804 = vst.msk [vmem:[%s2 + $0x468] sm:$0xff] %vm662, %v542
  %805 = vst [vmem:[%s2 + $0x470] sm:$0xff] %v543
  %806 = vst.msk [vmem:[%s2 + $0x478] sm:$0xff] %vm662, %v544
  %807 = vst [vmem:[%s2 + $0x480] sm:$0xff] %v545
  %808 = vst.msk [vmem:[%s2 + $0x488] sm:$0xff] %vm662, %v546
  %809 = vst [vmem:[%s2 + $0x490] sm:$0xff] %v547
  %810 = vst.msk [vmem:[%s2 + $0x498] sm:$0xff] %vm662, %v548
  %811 = vst [vmem:[%s2 + $0x4a0] sm:$0xff] %v549
  %812 = vst.msk [vmem:[%s2 + $0x4a8] sm:$0xff] %vm662, %v550
  %813 = vst [vmem:[%s2 + $0x4b0] sm:$0xff] %v551
  %814 = vst.msk [vmem:[%s2 + $0x4b8] sm:$0xff] %vm662, %v552
  %815 = vst [vmem:[%s2 + $0x4c0] sm:$0xff] %v553
  %816 = vst.msk [vmem:[%s2 + $0x4c8] sm:$0xff] %vm662, %v554
  %817 = vst [vmem:[%s2 + $0x4d0] sm:$0xff] %v555
  %818 = vst.msk [vmem:[%s2 + $0x4d8] sm:$0xff] %vm662, %v556
  %819 = vst [vmem:[%s2 + $0x4e0] sm:$0xff] %v557
  %820 = vst.msk [vmem:[%s2 + $0x4e8] sm:$0xff] %vm662, %v558
  %821 = vst [vmem:[%s2 + $0x4f0] sm:$0xff] %v559
  %822 = vst.msk [vmem:[%s2 + $0x4f8] sm:$0xff] %vm662, %v560
  %823 = vst [vmem:[%s2 + $0x500] sm:$0xff] %v561
  %824 = vst.msk [vmem:[%s2 + $0x508] sm:$0xff] %vm662, %v562
  %825 = vst [vmem:[%s2 + $0x510] sm:$0xff] %v563
  %826 = vst.msk [vmem:[%s2 + $0x518] sm:$0xff] %vm662, %v564
  %827 = vst [vmem:[%s2 + $0x520] sm:$0xff] %v565
  %828 = vst.msk [vmem:[%s2 + $0x528] sm:$0xff] %vm662, %v566
  %829 = vst [vmem:[%s2 + $0x530] sm:$0xff] %v567
  %830 = vst.msk [vmem:[%s2 + $0x538] sm:$0xff] %vm662, %v568
  %831 = vst [vmem:[%s2 + $0x540] sm:$0xff] %v569
  %832 = vst.msk [vmem:[%s2 + $0x548] sm:$0xff] %vm662, %v570
  %833 = vst [vmem:[%s2 + $0x550] sm:$0xff] %v571
  %834 = vst.msk [vmem:[%s2 + $0x558] sm:$0xff] %vm662, %v572
  %835 = vst [vmem:[%s2 + $0x560] sm:$0xff] %v573
  %836 = vst.msk [vmem:[%s2 + $0x568] sm:$0xff] %vm662, %v574
  %837 = vst [vmem:[%s2 + $0x570] sm:$0xff] %v575
  %838 = vst.msk [vmem:[%s2 + $0x578] sm:$0xff] %vm662, %v576
  %839 = vst [vmem:[%s2 + $0x580] sm:$0xff] %v577
  %840 = vst.msk [vmem:[%s2 + $0x588] sm:$0xff] %vm662, %v578
  %841 = vst [vmem:[%s2 + $0x590] sm:$0xff] %v579
  %842 = vst.msk [vmem:[%s2 + $0x598] sm:$0xff] %vm662, %v580
  %843 = vst [vmem:[%s2 + $0x5a0] sm:$0xff] %v581
  %844 = vst.msk [vmem:[%s2 + $0x5a8] sm:$0xff] %vm662, %v582
  %845 = vst [vmem:[%s2 + $0x5b0] sm:$0xff] %v583
  %846 = vst.msk [vmem:[%s2 + $0x5b8] sm:$0xff] %vm662, %v584
  %847 = vst [vmem:[%s2 + $0x5c0] sm:$0xff] %v585
  %848 = vst.msk [vmem:[%s2 + $0x5c8] sm:$0xff] %vm662, %v586
  %849 = vst [vmem:[%s2 + $0x5d0] sm:$0xff] %v587
  %850 = vst.msk [vmem:[%s2 + $0x5d8] sm:$0xff] %vm662, %v588
  %851 = vst [vmem:[%s2 + $0x5e0] sm:$0xff] %v589
  %852 = vst.msk [vmem:[%s2 + $0x5e8] sm:$0xff] %vm662, %v590
  %853 = vst [vmem:[%s2 + $0x5f0] sm:$0xff] %v591
  %854 = vst.msk [vmem:[%s2 + $0x5f8] sm:$0xff] %vm662, %v592
  %855 = vst [vmem:[%s2 + $0x600] sm:$0xff] %v593
  %856 = vst.msk [vmem:[%s2 + $0x608] sm:$0xff] %vm662, %v594
  %857 = vst [vmem:[%s2 + $0x610] sm:$0xff] %v595
  %858 = vst.msk [vmem:[%s2 + $0x618] sm:$0xff] %vm662, %v596
  %859 = vst [vmem:[%s2 + $0x620] sm:$0xff] %v597
  %860 = vst.msk [vmem:[%s2 + $0x628] sm:$0xff] %vm662, %v598
  %861 = vst [vmem:[%s2 + $0x630] sm:$0xff] %v599
  %862 = vst.msk [vmem:[%s2 + $0x638] sm:$0xff] %vm662, %v600
  %863 = vst [vmem:[%s2 + $0x640] sm:$0xff] %v601
  %864 = vst.msk [vmem:[%s2 + $0x648] sm:$0xff] %vm662, %v602
  %865 = vst [vmem:[%s2 + $0x650] sm:$0xff] %v603
  %866 = vst.msk [vmem:[%s2 + $0x658] sm:$0xff] %vm662, %v604
  %867 = vst [vmem:[%s2 + $0x660] sm:$0xff] %v605
  %868 = vst.msk [vmem:[%s2 + $0x668] sm:$0xff] %vm662, %v606
  %869 = vst [vmem:[%s2 + $0x670] sm:$0xff] %v607
  %870 = vst.msk [vmem:[%s2 + $0x678] sm:$0xff] %vm662, %v608
  %871 = vst [vmem:[%s2 + $0x680] sm:$0xff] %v609
  %872 = vst.msk [vmem:[%s2 + $0x688] sm:$0xff] %vm662, %v610
  %873 = vst [vmem:[%s2 + $0x690] sm:$0xff] %v611
  %874 = vst.msk [vmem:[%s2 + $0x698] sm:$0xff] %vm662, %v612
  %875 = vst [vmem:[%s2 + $0x6a0] sm:$0xff] %v613
  %876 = vst.msk [vmem:[%s2 + $0x6a8] sm:$0xff] %vm662, %v614
  %877 = vst [vmem:[%s2 + $0x6b0] sm:$0xff] %v615
  %878 = vst.msk [vmem:[%s2 + $0x6b8] sm:$0xff] %vm662, %v616
  %879 = vst [vmem:[%s2 + $0x6c0] sm:$0xff] %v617
  %880 = vst.msk [vmem:[%s2 + $0x6c8] sm:$0xff] %vm662, %v618
  %881 = vst [vmem:[%s2 + $0x6d0] sm:$0xff] %v619
  %882 = vst.msk [vmem:[%s2 + $0x6d8] sm:$0xff] %vm662, %v620
  %883 = vst [vmem:[%s2 + $0x6e0] sm:$0xff] %v621
  %884 = vst.msk [vmem:[%s2 + $0x6e8] sm:$0xff] %vm662, %v622
  %885 = vst [vmem:[%s2 + $0x6f0] sm:$0xff] %v623
  %886 = vst.msk [vmem:[%s2 + $0x6f8] sm:$0xff] %vm662, %v624
  %887 = vst [vmem:[%s2 + $0x700] sm:$0xff] %v625
  %888 = vst.msk [vmem:[%s2 + $0x708] sm:$0xff] %vm662, %v626
  %889 = vst [vmem:[%s2 + $0x710] sm:$0xff] %v627
  %890 = vst.msk [vmem:[%s2 + $0x718] sm:$0xff] %vm662, %v628
  %891 = vst [vmem:[%s2 + $0x720] sm:$0xff] %v629
  %892 = vst.msk [vmem:[%s2 + $0x728] sm:$0xff] %vm662, %v630
  %893 = vst [vmem:[%s2 + $0x730] sm:$0xff] %v631
  %894 = vst.msk [vmem:[%s2 + $0x738] sm:$0xff] %vm662, %v632
  %895 = vst [vmem:[%s2 + $0x740] sm:$0xff] %v633
  %896 = vst.msk [vmem:[%s2 + $0x748] sm:$0xff] %vm662, %v634
  %897 = vst [vmem:[%s2 + $0x750] sm:$0xff] %v635
  %898 = vst.msk [vmem:[%s2 + $0x758] sm:$0xff] %vm662, %v636
  %899 = vst [vmem:[%s2 + $0x760] sm:$0xff] %v637
  %900 = vst.msk [vmem:[%s2 + $0x768] sm:$0xff] %vm662, %v638
  %901 = vst [vmem:[%s2 + $0x770] sm:$0xff] %v639
  %902 = vst.msk [vmem:[%s2 + $0x778] sm:$0xff] %vm662, %v640
  %903 = vst [vmem:[%s2 + $0x780] sm:$0xff] %v641
  %904 = vst.msk [vmem:[%s2 + $0x788] sm:$0xff] %vm662, %v642
  %905 = vst [vmem:[%s2 + $0x790] sm:$0xff] %v643
  %906 = vst.msk [vmem:[%s2 + $0x798] sm:$0xff] %vm662, %v644
  %907 = vst [vmem:[%s2 + $0x7a0] sm:$0xff] %v645
  %908 = vst.msk [vmem:[%s2 + $0x7a8] sm:$0xff] %vm662, %v646
  %909 = vst [vmem:[%s2 + $0x7b0] sm:$0xff] %v647
  %910 = vst.msk [vmem:[%s2 + $0x7b8] sm:$0xff] %vm662, %v648
  %911 = vst [vmem:[%s2 + $0x7c0] sm:$0xff] %v649
  %912 = vst.msk [vmem:[%s2 + $0x7c8] sm:$0xff] %vm662, %v650
  %913 = vst [vmem:[%s2 + $0x7d0] sm:$0xff] %v651
  %914 = vst.msk [vmem:[%s2 + $0x7d8] sm:$0xff] %vm662, %v652
  %915 = vst [vmem:[%s2 + $0x7e0] sm:$0xff] %v653
  %916 = vst.msk [vmem:[%s2 + $0x7e8] sm:$0xff] %vm662, %v654
  %917 = vst [vmem:[%s2 + $0x7f0] sm:$0xff] %v655
  %918 = vst.msk [vmem:[%s2 + $0x7f8] sm:$0xff] %vm662, %v656
  %919 = vst [vmem:[%s2 + $0x800] sm:$0xff] %v657
  %920 = vst.msk [vmem:[%s2 + $0x808] sm:$0xff] %vm662, %v658
  %921 = vst [vmem:[%s2 + $0x810] sm:$0x1] %v659
  %922 = vst.msk [vmem:[%s2 + $0x818] sm:$0x1] %vm791, %v660
  // Predicated region
  $region10: #{tpu_custom_call.1} parent=0 // pred_check
    _
  $region11: #{tpu_custom_call.1} parent=0 // pred_check_branch
    %924 = sbr.rel (0) target = $region13
  $region12: #{tpu_custom_call.1} parent=0 // pred_region
    _
  $region13: #{tpu_custom_call.1} parent=0 // pred_fallthru
    _
  // Predicated region
  $region14: #{tpu_custom_call.1} parent=0 // pred_check
    _
  $region15: #{tpu_custom_call.1} parent=0 // pred_check_branch
    %926 = sbr.rel (0) target = $region17
  $region16: #{tpu_custom_call.1} parent=0 // pred_region
    _
  $region17: #{tpu_custom_call.1} parent=0 // pred_fallthru
    _

</llo_original>
